<compile_context>
chip_gen: v7x
topology: tpu7x:2x2x1
jax: 0.10.0
libtpu: 0.0.40
codegen_flags: <defaults>
</compile_context>

<pallas_src>
import functools

import jax
import jax.numpy as jnp
import numpy as np
from jax.experimental import pallas as pl
from jax.experimental.pallas import tpu as pltpu


# ----------------------------------------------------------------------------
# Kernel 1: per-channel sum and sum-of-squares of mu, accumulated over batch.
# ----------------------------------------------------------------------------
def _stats_kernel(mu_ref, sum_ref, sqsum_ref):
    b = pl.program_id(0)
    x = mu_ref[0]                               # [C, HW]  (lanes = HW)
    s = jnp.sum(x, axis=1)[None, :]             # [1, C]
    sq = jnp.sum(x * x, axis=1)[None, :]        # [1, C]

    @pl.when(b == 0)
    def _():
        sum_ref[...] = jnp.zeros_like(sum_ref)
        sqsum_ref[...] = jnp.zeros_like(sqsum_ref)

    sum_ref[...] += s
    sqsum_ref[...] += sq


# ----------------------------------------------------------------------------
# Kernel 2: fused affine apply for mu and sigma (one grid step per batch elem).
#   mu_out    = mu * a_mu + b_mu        (per-channel, channel on sublane axis)
#   sigma_out = sigma * a_sig + b_sig   (per-channel, channel on lane axis)
# ----------------------------------------------------------------------------
def _apply_kernel(mu_ref, sig_ref, amu_ref, bmu_ref, asig_ref, bsig_ref,
                  mu_out_ref, sig_out_ref):
    # mu block: (1, C, HW); coefficients [C, 1] broadcast along lanes (cheap).
    mu_out_ref[0] = mu_ref[0] * amu_ref[...] + bmu_ref[...]
    # sigma block: (1, M, C); coefficients [1, C] broadcast along sublanes.
    sig_out_ref[0] = sig_ref[0] * asig_ref[...] + bsig_ref[...]


# ----------------------------------------------------------------------------
# Wrapper mirroring VDP_BatchNorm.forward (functional: returns new running
# stats instead of mutating module buffers).
# ----------------------------------------------------------------------------
def vdp_batchnorm_forward(mu, sigma, gamma, beta, running_mean, running_var,
                          *, eps=1e-5, momentum=0.1, training=True):
    f32 = jnp.float32
    B, C, H, W = mu.shape
    HW = H * W
    assert sigma.shape[0] == B and sigma.shape[-1] == C, (
        "sigma must be [B, ..., C] (channel-last, per the module's broadcast)")
    sig_shape = sigma.shape
    M = int(np.prod(sig_shape[1:-1])) if len(sig_shape) > 2 else 1

    mu3 = mu.reshape(B, C, HW).astype(f32)      # lanes = HW (dense stores)
    sig3 = sigma.reshape(B, M, C).astype(f32)   # natural channel-last layout
    gamma = gamma.astype(f32)
    beta = beta.astype(f32)
    running_mean = running_mean.astype(f32)
    running_var = running_var.astype(f32)

    if training:
        # Batch statistics over (B, H, W) per channel, computed in Pallas.
        ssum, sqsum = pl.pallas_call(
            _stats_kernel,
            out_shape=(jax.ShapeDtypeStruct((1, C), f32),
                       jax.ShapeDtypeStruct((1, C), f32)),
            grid=(B,),
            in_specs=[pl.BlockSpec((1, C, HW), lambda b: (b, 0, 0))],
            out_specs=(pl.BlockSpec((1, C), lambda b: (0, 0)),
                       pl.BlockSpec((1, C), lambda b: (0, 0))),
            compiler_params=pltpu.CompilerParams(
                dimension_semantics=("arbitrary",)),
        )(mu3)

        n = B * HW
        mean = ssum[0] / n                                        # [C]
        var_b = jnp.maximum(sqsum[0] / n - mean * mean, 0.0)      # biased var
        var_u = var_b * (n / max(n - 1, 1))                       # unbiased var
        new_running_mean = (1.0 - momentum) * running_mean + momentum * mean
        new_running_var = (1.0 - momentum) * running_var + momentum * var_u
        norm_mean, norm_var = mean, var_b
    else:
        new_running_mean, new_running_var = running_mean, running_var
        norm_mean, norm_var = running_mean, running_var

    # Grid-invariant per-channel coefficients (hoisted out of the kernel).
    inv_std = jax.lax.rsqrt(norm_var + eps)
    a_mu = gamma * inv_std                       # [C]
    b_mu = beta - norm_mean * a_mu               # [C]
    # sigma path uses running_var as observed AFTER the BatchNorm2d call
    # (i.e. the freshly updated value when training).
    a_sig = gamma / (new_running_var + eps)      # [C]
    b_sig = beta                                 # [C]

    # TODO(synk): for very large H*W or sigma, add a spatial/M tile grid axis;
    # the per-batch full block is ample at these demo shapes.
    mu_out3, sig_out3 = pl.pallas_call(
        _apply_kernel,
        out_shape=(jax.ShapeDtypeStruct((B, C, HW), f32),
                   jax.ShapeDtypeStruct((B, M, C), f32)),
        grid=(B,),
        in_specs=[
            pl.BlockSpec((1, C, HW), lambda b: (b, 0, 0)),
            pl.BlockSpec((1, M, C), lambda b: (b, 0, 0)),
            pl.BlockSpec((C, 1), lambda b: (0, 0)),
            pl.BlockSpec((C, 1), lambda b: (0, 0)),
            pl.BlockSpec((1, C), lambda b: (0, 0)),
            pl.BlockSpec((1, C), lambda b: (0, 0)),
        ],
        out_specs=(pl.BlockSpec((1, C, HW), lambda b: (b, 0, 0)),
                   pl.BlockSpec((1, M, C), lambda b: (b, 0, 0))),
        compiler_params=pltpu.CompilerParams(
            dimension_semantics=("parallel",)),
    )(mu3, sig3,
      a_mu.reshape(C, 1), b_mu.reshape(C, 1),
      a_sig.reshape(1, C), b_sig.reshape(1, C))

    mu_bn = mu_out3.reshape(B, C, H, W)
    sigma_bn = sig_out3.reshape(sig_shape)
    return mu_bn, sigma_bn, new_running_mean, new_running_var


# ----------------------------------------------------------------------------
# Pure-JAX reference (verification only)
# ----------------------------------------------------------------------------
def reference_forward(mu, sigma, gamma, beta, running_mean, running_var,
                      eps=1e-5, momentum=0.1, training=True):
    mu = mu.astype(jnp.float32)
    if training:
        mean = jnp.mean(mu, axis=(0, 2, 3))
        var_b = jnp.var(mu, axis=(0, 2, 3))                   # biased (ddof=0)
        n = mu.shape[0] * mu.shape[2] * mu.shape[3]
        var_u = var_b * n / (n - 1)
        rm = (1.0 - momentum) * running_mean + momentum * mean
        rv = (1.0 - momentum) * running_var + momentum * var_u
        nm, nv = mean, var_b
    else:
        rm, rv = running_mean, running_var
        nm, nv = running_mean, running_var
    mu_bn = ((mu - nm[None, :, None, None])
             / jnp.sqrt(nv[None, :, None, None] + eps)
             * gamma[None, :, None, None] + beta[None, :, None, None])
    # torch right-aligned broadcasting: per-channel vectors hit sigma's last axis
    sigma_bn = sigma * (1.0 / (rv + eps)) * gamma + beta
    return mu_bn, sigma_bn, rm, rv


if __name__ == "__main__":
    B, C, H, W = 2, 8, 16, 16            # HW = 256 -> lane-dense mu stores

    key = jax.random.PRNGKey(0)
    k1, k2, k3, k4 = jax.random.split(key, 4)

    mu = 2.0 * jax.random.normal(k1, (B, C, H, W), jnp.float32) + 0.5
    # sigma: channel-last variance tensor (last dim == num_features), matching
    # the module's right-aligned broadcast of running_var / weight / bias.
    sigma = jax.random.uniform(k2, (B, H * W, C), jnp.float32,
                               minval=0.0, maxval=1.0)

    gamma = 1.0 + 0.1 * jax.random.normal(k3, (C,), jnp.float32)  # BN weight
    beta = 0.1 * jax.random.normal(k4, (C,), jnp.float32)         # BN bias
    running_mean = jnp.zeros((C,), jnp.float32)
    running_var = jnp.ones((C,), jnp.float32)

    fwd_train = jax.jit(functools.partial(
        vdp_batchnorm_forward, eps=1e-5, momentum=0.1, training=True))
    fwd_eval = jax.jit(functools.partial(
        vdp_batchnorm_forward, eps=1e-5, momentum=0.1, training=False))

    mu_bn, sigma_bn, rm_new, rv_new = fwd_train(
        mu, sigma, gamma, beta, running_mean, running_var)
    jax.block_until_ready((mu_bn, sigma_bn, rm_new, rv_new))

    mu_bn_e, sigma_bn_e, _, _ = fwd_eval(
        mu, sigma, gamma, beta, running_mean, running_var)
    jax.block_until_ready((mu_bn_e, sigma_bn_e))

    # Verify against the pure-JAX reference.
    r_mu, r_sig, r_rm, r_rv = reference_forward(
        mu, sigma, gamma, beta, running_mean, running_var, training=True)
    np.testing.assert_allclose(np.asarray(mu_bn), np.asarray(r_mu),
                               rtol=1e-4, atol=1e-5)
    np.testing.assert_allclose(np.asarray(sigma_bn), np.asarray(r_sig),
                               rtol=1e-4, atol=1e-5)
    np.testing.assert_allclose(np.asarray(rm_new), np.asarray(r_rm),
                               rtol=1e-4, atol=1e-6)
    np.testing.assert_allclose(np.asarray(rv_new), np.asarray(r_rv),
                               rtol=1e-4, atol=1e-6)

    r_mu_e, r_sig_e, _, _ = reference_forward(
        mu, sigma, gamma, beta, running_mean, running_var, training=False)
    np.testing.assert_allclose(np.asarray(mu_bn_e), np.asarray(r_mu_e),
                               rtol=1e-4, atol=1e-5)
    np.testing.assert_allclose(np.asarray(sigma_bn_e), np.asarray(r_sig_e),
                               rtol=1e-4, atol=1e-5)

    print("KERNEL_OK")
</pallas_src>

<mosaic_0001>
module attributes {stable_mosaic.version = 11 : i64} {
  func.func @_stats_kernel(%arg0: i32, %arg1: memref<1x8x256xf32, #tpu.memory_space<vmem>>, %arg2: memref<1x8xf32, #tpu.memory_space<vmem>>, %arg3: memref<1x8xf32, #tpu.memory_space<vmem>>) attributes {dimension_semantics = [#tpu.dimension_semantics<arbitrary>], iteration_bounds = array<i64: 2>, scalar_prefetch = 0 : i64, scratch_operands = 0 : i64, tpu.core_type = #tpu.core_type<tc>, window_params = [{transform_indices = @transform_0, window_bounds = array<i64: 1, 8, 256>}, {pipeline_mode = #tpu.pipeline_mode<synchronous>, transform_indices = @transform_1, window_bounds = array<i64: 1, 8>}, {pipeline_mode = #tpu.pipeline_mode<synchronous>, transform_indices = @transform_2, window_bounds = array<i64: 1, 8>}]} {
    %c0 = arith.constant 0 : index
    %c0_0 = arith.constant 0 : index
    %c0_1 = arith.constant 0 : index
    %0 = vector.load %arg1[%c0, %c0_0, %c0_1] : memref<1x8x256xf32, #tpu.memory_space<vmem>>, vector<1x8x256xf32>
    %1 = vector.shape_cast %0 : vector<1x8x256xf32> to vector<8x256xf32>
    %cst = arith.constant dense<0.000000e+00> : vector<8xf32>
    %2 = vector.multi_reduction <add>, %1, %cst [1] : vector<8x256xf32> to vector<8xf32>
    %3 = vector.shape_cast %2 : vector<8xf32> to vector<1x8xf32>
    %4 = arith.mulf %1, %1 : vector<8x256xf32>
    %cst_2 = arith.constant dense<0.000000e+00> : vector<8xf32>
    %5 = vector.multi_reduction <add>, %4, %cst_2 [1] : vector<8x256xf32> to vector<8xf32>
    %6 = vector.shape_cast %5 : vector<8xf32> to vector<1x8xf32>
    %c0_i32 = arith.constant 0 : i32
    %7 = arith.cmpi eq, %arg0, %c0_i32 : i32
    %8 = arith.extui %7 : i1 to i32
    %c0_i32_3 = arith.constant 0 : i32
    %9 = arith.cmpi ne, %8, %c0_i32_3 : i32
    scf.if %9 {
      %cst_12 = arith.constant 0.000000e+00 : f32
      %16 = vector.broadcast %cst_12 : f32 to vector<1x8xf32>
      %c0_13 = arith.constant 0 : index
      %c0_14 = arith.constant 0 : index
      %17 = vector.load %arg2[%c0_13, %c0_14] : memref<1x8xf32, #tpu.memory_space<vmem>>, vector<1x8xf32>
      tpu.vector_store %arg2[%c0_13, %c0_14], %16 {strides = array<i32>} : memref<1x8xf32, #tpu.memory_space<vmem>>, vector<1x8xf32>,
      %cst_15 = arith.constant 0.000000e+00 : f32
      %18 = vector.broadcast %cst_15 : f32 to vector<1x8xf32>
      %c0_16 = arith.constant 0 : index
      %c0_17 = arith.constant 0 : index
      %19 = vector.load %arg3[%c0_16, %c0_17] : memref<1x8xf32, #tpu.memory_space<vmem>>, vector<1x8xf32>
      tpu.vector_store %arg3[%c0_16, %c0_17], %18 {strides = array<i32>} : memref<1x8xf32, #tpu.memory_space<vmem>>, vector<1x8xf32>,
    } else {
    }
    %c0_4 = arith.constant 0 : index
    %c0_5 = arith.constant 0 : index
    %10 = vector.load %arg2[%c0_4, %c0_5] : memref<1x8xf32, #tpu.memory_space<vmem>>, vector<1x8xf32>
    %11 = arith.addf %10, %3 : vector<1x8xf32>
    %c0_6 = arith.constant 0 : index
    %c0_7 = arith.constant 0 : index
    %12 = vector.load %arg2[%c0_6, %c0_7] : memref<1x8xf32, #tpu.memory_space<vmem>>, vector<1x8xf32>
    tpu.vector_store %arg2[%c0_6, %c0_7], %11 {strides = array<i32>} : memref<1x8xf32, #tpu.memory_space<vmem>>, vector<1x8xf32>,
    %c0_8 = arith.constant 0 : index
    %c0_9 = arith.constant 0 : index
    %13 = vector.load %arg3[%c0_8, %c0_9] : memref<1x8xf32, #tpu.memory_space<vmem>>, vector<1x8xf32>
    %14 = arith.addf %13, %6 : vector<1x8xf32>
    %c0_10 = arith.constant 0 : index
    %c0_11 = arith.constant 0 : index
    %15 = vector.load %arg3[%c0_10, %c0_11] : memref<1x8xf32, #tpu.memory_space<vmem>>, vector<1x8xf32>
    tpu.vector_store %arg3[%c0_10, %c0_11], %14 {strides = array<i32>} : memref<1x8xf32, #tpu.memory_space<vmem>>, vector<1x8xf32>,
    return
  }
  func.func @transform_0(%arg0: i32) -> (i32, i32, i32) {
    %c0_i32 = arith.constant 0 : i32
    %c0_i32_0 = arith.constant 0 : i32
    %c0_i32_1 = arith.constant 0 : i32
    return %arg0, %c0_i32, %c0_i32_0 : i32, i32, i32
  }
  func.func @transform_1(%arg0: i32) -> (i32, i32) {
    %c0_i32 = arith.constant 0 : i32
    %c0_i32_0 = arith.constant 0 : i32
    %c0_i32_1 = arith.constant 0 : i32
    return %c0_i32, %c0_i32_0 : i32, i32
  }
  func.func @transform_2(%arg0: i32) -> (i32, i32) {
    %c0_i32 = arith.constant 0 : i32
    %c0_i32_0 = arith.constant 0 : i32
    %c0_i32_1 = arith.constant 0 : i32
    return %c0_i32, %c0_i32_0 : i32, i32
  }
}

module attributes {stable_mosaic.version = 11 : i64} {
  func.func @_apply_kernel(%arg0: i32, %arg1: memref<1x8x256xf32, #tpu.memory_space<vmem>>, %arg2: memref<1x256x8xf32, #tpu.memory_space<vmem>>, %arg3: memref<8x1xf32, #tpu.memory_space<vmem>>, %arg4: memref<8x1xf32, #tpu.memory_space<vmem>>, %arg5: memref<1x8xf32, #tpu.memory_space<vmem>>, %arg6: memref<1x8xf32, #tpu.memory_space<vmem>>, %arg7: memref<1x8x256xf32, #tpu.memory_space<vmem>>, %arg8: memref<1x256x8xf32, #tpu.memory_space<vmem>>) attributes {dimension_semantics = [#tpu.dimension_semantics<parallel>], iteration_bounds = array<i64: 2>, scalar_prefetch = 0 : i64, scratch_operands = 0 : i64, tpu.core_type = #tpu.core_type<tc>, window_params = [{transform_indices = @transform_0, window_bounds = array<i64: 1, 8, 256>}, {transform_indices = @transform_1, window_bounds = array<i64: 1, 256, 8>}, {pipeline_mode = #tpu.pipeline_mode<synchronous>, transform_indices = @transform_2, window_bounds = array<i64: 8, 1>}, {pipeline_mode = #tpu.pipeline_mode<synchronous>, transform_indices = @transform_3, window_bounds = array<i64: 8, 1>}, {pipeline_mode = #tpu.pipeline_mode<synchronous>, transform_indices = @transform_4, window_bounds = array<i64: 1, 8>}, {pipeline_mode = #tpu.pipeline_mode<synchronous>, transform_indices = @transform_5, window_bounds = array<i64: 1, 8>}, {transform_indices = @transform_6, window_bounds = array<i64: 1, 8, 256>}, {transform_indices = @transform_7, window_bounds = array<i64: 1, 256, 8>}]} {
    %c0 = arith.constant 0 : index
    %c0_0 = arith.constant 0 : index
    %c0_1 = arith.constant 0 : index
    %0 = vector.load %arg1[%c0, %c0_0, %c0_1] : memref<1x8x256xf32, #tpu.memory_space<vmem>>, vector<1x8x256xf32>
    %1 = vector.shape_cast %0 : vector<1x8x256xf32> to vector<8x256xf32>
    %c0_2 = arith.constant 0 : index
    %c0_3 = arith.constant 0 : index
    %2 = vector.load %arg3[%c0_2, %c0_3] : memref<8x1xf32, #tpu.memory_space<vmem>>, vector<8x1xf32>
    %3 = vector.broadcast %2 : vector<8x1xf32> to vector<8x256xf32>
    %4 = arith.mulf %1, %3 : vector<8x256xf32>
    %c0_4 = arith.constant 0 : index
    %c0_5 = arith.constant 0 : index
    %5 = vector.load %arg4[%c0_4, %c0_5] : memref<8x1xf32, #tpu.memory_space<vmem>>, vector<8x1xf32>
    %6 = vector.broadcast %5 : vector<8x1xf32> to vector<8x256xf32>
    %7 = arith.addf %4, %6 : vector<8x256xf32>
    %c0_6 = arith.constant 0 : index
    %c0_7 = arith.constant 0 : index
    %c0_8 = arith.constant 0 : index
    %8 = vector.load %arg7[%c0_6, %c0_7, %c0_8] : memref<1x8x256xf32, #tpu.memory_space<vmem>>, vector<1x8x256xf32>
    %9 = vector.shape_cast %8 : vector<1x8x256xf32> to vector<8x256xf32>
    %10 = vector.shape_cast %7 : vector<8x256xf32> to vector<1x8x256xf32>
    tpu.vector_store %arg7[%c0_6, %c0_7, %c0_8], %10 {strides = array<i32>} : memref<1x8x256xf32, #tpu.memory_space<vmem>>, vector<1x8x256xf32>,
    %c0_9 = arith.constant 0 : index
    %c0_10 = arith.constant 0 : index
    %c0_11 = arith.constant 0 : index
    %11 = vector.load %arg2[%c0_9, %c0_10, %c0_11] : memref<1x256x8xf32, #tpu.memory_space<vmem>>, vector<1x256x8xf32>
    %12 = vector.shape_cast %11 : vector<1x256x8xf32> to vector<256x8xf32>
    %c0_12 = arith.constant 0 : index
    %c0_13 = arith.constant 0 : index
    %13 = vector.load %arg5[%c0_12, %c0_13] : memref<1x8xf32, #tpu.memory_space<vmem>>, vector<1x8xf32>
    %14 = vector.broadcast %13 : vector<1x8xf32> to vector<256x8xf32>
    %15 = arith.mulf %12, %14 : vector<256x8xf32>
    %c0_14 = arith.constant 0 : index
    %c0_15 = arith.constant 0 : index
    %16 = vector.load %arg6[%c0_14, %c0_15] : memref<1x8xf32, #tpu.memory_space<vmem>>, vector<1x8xf32>
    %17 = vector.broadcast %16 : vector<1x8xf32> to vector<256x8xf32>
    %18 = arith.addf %15, %17 : vector<256x8xf32>
    %c0_16 = arith.constant 0 : index
    %c0_17 = arith.constant 0 : index
    %c0_18 = arith.constant 0 : index
    %19 = vector.load %arg8[%c0_16, %c0_17, %c0_18] : memref<1x256x8xf32, #tpu.memory_space<vmem>>, vector<1x256x8xf32>
    %20 = vector.shape_cast %19 : vector<1x256x8xf32> to vector<256x8xf32>
    %21 = vector.shape_cast %18 : vector<256x8xf32> to vector<1x256x8xf32>
    tpu.vector_store %arg8[%c0_16, %c0_17, %c0_18], %21 {strides = array<i32>} : memref<1x256x8xf32, #tpu.memory_space<vmem>>, vector<1x256x8xf32>,
    return
  }
  func.func @transform_0(%arg0: i32) -> (i32, i32, i32) {
    %c0_i32 = arith.constant 0 : i32
    %c0_i32_0 = arith.constant 0 : i32
    %c0_i32_1 = arith.constant 0 : i32
    return %arg0, %c0_i32, %c0_i32_0 : i32, i32, i32
  }
  func.func @transform_1(%arg0: i32) -> (i32, i32, i32) {
    %c0_i32 = arith.constant 0 : i32
    %c0_i32_0 = arith.constant 0 : i32
    %c0_i32_1 = arith.constant 0 : i32
    return %arg0, %c0_i32, %c0_i32_0 : i32, i32, i32
  }
  func.func @transform_2(%arg0: i32) -> (i32, i32) {
    %c0_i32 = arith.constant 0 : i32
    %c0_i32_0 = arith.constant 0 : i32
    %c0_i32_1 = arith.constant 0 : i32
    return %c0_i32, %c0_i32_0 : i32, i32
  }
  func.func @transform_3(%arg0: i32) -> (i32, i32) {
    %c0_i32 = arith.constant 0 : i32
    %c0_i32_0 = arith.constant 0 : i32
    %c0_i32_1 = arith.constant 0 : i32
    return %c0_i32, %c0_i32_0 : i32, i32
  }
  func.func @transform_4(%arg0: i32) -> (i32, i32) {
    %c0_i32 = arith.constant 0 : i32
    %c0_i32_0 = arith.constant 0 : i32
    %c0_i32_1 = arith.constant 0 : i32
    return %c0_i32, %c0_i32_0 : i32, i32
  }
  func.func @transform_5(%arg0: i32) -> (i32, i32) {
    %c0_i32 = arith.constant 0 : i32
    %c0_i32_0 = arith.constant 0 : i32
    %c0_i32_1 = arith.constant 0 : i32
    return %c0_i32, %c0_i32_0 : i32, i32
  }
  func.func @transform_6(%arg0: i32) -> (i32, i32, i32) {
    %c0_i32 = arith.constant 0 : i32
    %c0_i32_0 = arith.constant 0 : i32
    %c0_i32_1 = arith.constant 0 : i32
    return %arg0, %c0_i32, %c0_i32_0 : i32, i32, i32
  }
  func.func @transform_7(%arg0: i32) -> (i32, i32, i32) {
    %c0_i32 = arith.constant 0 : i32
    %c0_i32_0 = arith.constant 0 : i32
    %c0_i32_1 = arith.constant 0 : i32
    return %arg0, %c0_i32, %c0_i32_0 : i32, i32, i32
  }
}

</mosaic_0001>

<llo_original>
// kernel: vdp_batchnorm_forward.3
$region0: #{vdp_batchnorm_forward.3}
  #allocation0 [shape = 'u32[]', space=smem, size = 0x4, offset = 0x4, fixed_abs, tag = 'smem constant byte address 0x4 - core index']
  #allocation1 [shape = 'u32[144,128]{1,0:T(1,128)}', space=vmem, size = 0x12000, scoped, tag = 'internal scratch']
  %s0 = inlined_call_operand.vmem [shape: f32[2,8,256], index: 0, kind: input, shape index: {}]
  %s1 = inlined_call_operand.vmem [shape: f32[2,256,8], index: 1, kind: input, shape index: {}]
  %s2 = inlined_call_operand.vmem [shape: f32[8,1], index: 2, kind: input, shape index: {}]
  %s3 = inlined_call_operand.vmem [shape: f32[8,1], index: 3, kind: input, shape index: {}]
  %s4 = inlined_call_operand.vmem [shape: f32[1,8], index: 4, kind: input, shape index: {}]
  %s5 = inlined_call_operand.vmem [shape: f32[1,8], index: 5, kind: input, shape index: {}]
  %s6 = inlined_call_operand.vmem [shape: f32[2,8,256], index: 6, kind: output, shape index: {0}]
  %s7 = inlined_call_operand.vmem [shape: f32[2,256,8], index: 7, kind: output, shape index: {1}]
  %8 = xla_tuple %s6, %s7
  %s9 = sld [smem:[#allocation0]]
  $region65: #{vdp_batchnorm_forward.3} parent=0
    _
  %s11 = ssub.s32 1, %s9
  %s12 = scalar_select 0, %s11, %s9
  loop: start=0, step=1, limit=4
  $region2: #{vdp_batchnorm_forward.3} parent=0 // loop_pre_header
    _
  $region3: #{vdp_batchnorm_forward.3} parent=0 // loop_header
    %s14 = sphi 0, %s18
    %p15 = scmp.ge.s32.totalorder %s14, 4
    %s24 = sphi 0, %s26
    %s27 = sphi 0, %s24
    %s28 = sphi 0, %s27
    %s44 = sphi 0, %s28
    %s50 = sphi 0, %s52
    %s53 = sphi 0, %s50
    %s54 = sphi 0, %s53
    %s70 = sphi 0, %s54
    %s74 = sphi 0, %s74
    %s76 = sphi 0, %s74
    %s77 = sphi 0, %s76
    %s91 = sphi 0, %s77
    %s95 = sphi 0, %s95
    %s97 = sphi 0, %s95
    %s98 = sphi 0, %s97
    %s112 = sphi 0, %s98
    %s116 = sphi 0, %s116
    %s118 = sphi 0, %s116
    %s119 = sphi 0, %s118
    %s133 = sphi 0, %s119
    %s137 = sphi 0, %s137
    %s139 = sphi 0, %s137
    %s140 = sphi 0, %s139
    %s154 = sphi 0, %s140
    %s160 = sphi 0, %s162
    %s163 = sphi 0, %s160
    %s164 = sphi 0, %s163
    %s180 = sphi 0, %s164
    %s186 = sphi 0, %s188
    %s189 = sphi 0, %s186
    %s190 = sphi 0, %s189
    %s206 = sphi 0, %s190
  $region4: #{vdp_batchnorm_forward.3} parent=0 // loop_header_branch
    %17 = sbr.rel (%p15) target = $region8
  $region5: #{vdp_batchnorm_forward.3} parent=0 // loop_body
    %s19 = ssub.s32 %s14, 1
    %s20 = ssub.s32 %s14, 2
    %s21 = sadd.s32 %s14, 1
    %s22 = ssub.s32 %s14, %s21
    %p23 = scmp.eq.s32.totalorder %s22, 0
    %s25 = sadd.s32 %s24, 1
    %s26 = scalar_select %p23, %s24, %s25
    %p29 = pneg %p23
    %p30 = scmp.eq.s32.totalorder %s14, 1
    %p31 = por %p29, %p30
    %p32 = scmp.ne.s32.totalorder %s24, %s27
    %p33 = scmp.eq.s32.totalorder %s14, 0
    %p34 = por %p32, %p33
    %p35 = scmp.ne.s32.totalorder %s24, %s27
    %p36 = scmp.eq.s32.totalorder %s19, 1
    %p37 = por %p35, %p36
    %p38 = scmp.ne.s32.totalorder %s27, %s28
    %p39 = scmp.eq.s32.totalorder %s19, 0
    %p40 = por %p38, %p39
    %p41 = scmp.ne.s32.totalorder %s27, %s28
    %p42 = scmp.eq.s32.totalorder %s20, 1
    %p43 = por %p41, %p42
    %p45 = scmp.ne.s32.totalorder %s28, %s44
    %p46 = scmp.eq.s32.totalorder %s20, 0
    %p47 = por %p45, %p46
    %s48 = ssub.s32 %s14, %s21
    %p49 = scmp.eq.s32.totalorder %s48, 0
    %s51 = sadd.s32 %s50, 1
    %s52 = scalar_select %p49, %s50, %s51
    %p55 = pneg %p49
    %p56 = scmp.eq.s32.totalorder %s14, 1
    %p57 = por %p55, %p56
    %p58 = scmp.ne.s32.totalorder %s50, %s53
    %p59 = scmp.eq.s32.totalorder %s14, 0
    %p60 = por %p58, %p59
    %p61 = scmp.ne.s32.totalorder %s50, %s53
    %p62 = scmp.eq.s32.totalorder %s19, 1
    %p63 = por %p61, %p62
    %p64 = scmp.ne.s32.totalorder %s53, %s54
    %p65 = scmp.eq.s32.totalorder %s19, 0
    %p66 = por %p64, %p65
    %p67 = scmp.ne.s32.totalorder %s53, %s54
    %p68 = scmp.eq.s32.totalorder %s20, 1
    %p69 = por %p67, %p68
    %p71 = scmp.ne.s32.totalorder %s54, %s70
    %p72 = scmp.eq.s32.totalorder %s20, 0
    %p73 = por %p71, %p72
    %s75 = sadd.s32 %s74, 1
    %p78 = scmp.eq.s32.totalorder %s14, 1
    %p79 = scmp.ne.s32.totalorder %s74, %s76
    %p80 = scmp.eq.s32.totalorder %s14, 0
    %p81 = por %p79, %p80
    %p82 = scmp.ne.s32.totalorder %s74, %s76
    %p83 = scmp.eq.s32.totalorder %s19, 1
    %p84 = por %p82, %p83
    %p85 = scmp.ne.s32.totalorder %s76, %s77
    %p86 = scmp.eq.s32.totalorder %s19, 0
    %p87 = por %p85, %p86
    %p88 = scmp.ne.s32.totalorder %s76, %s77
    %p89 = scmp.eq.s32.totalorder %s20, 1
    %p90 = por %p88, %p89
    %p92 = scmp.ne.s32.totalorder %s77, %s91
    %p93 = scmp.eq.s32.totalorder %s20, 0
    %p94 = por %p92, %p93
    %s96 = sadd.s32 %s95, 1
    %p99 = scmp.eq.s32.totalorder %s14, 1
    %p100 = scmp.ne.s32.totalorder %s95, %s97
    %p101 = scmp.eq.s32.totalorder %s14, 0
    %p102 = por %p100, %p101
    %p103 = scmp.ne.s32.totalorder %s95, %s97
    %p104 = scmp.eq.s32.totalorder %s19, 1
    %p105 = por %p103, %p104
    %p106 = scmp.ne.s32.totalorder %s97, %s98
    %p107 = scmp.eq.s32.totalorder %s19, 0
    %p108 = por %p106, %p107
    %p109 = scmp.ne.s32.totalorder %s97, %s98
    %p110 = scmp.eq.s32.totalorder %s20, 1
    %p111 = por %p109, %p110
    %p113 = scmp.ne.s32.totalorder %s98, %s112
    %p114 = scmp.eq.s32.totalorder %s20, 0
    %p115 = por %p113, %p114
    %s117 = sadd.s32 %s116, 1
    %p120 = scmp.eq.s32.totalorder %s14, 1
    %p121 = scmp.ne.s32.totalorder %s116, %s118
    %p122 = scmp.eq.s32.totalorder %s14, 0
    %p123 = por %p121, %p122
    %p124 = scmp.ne.s32.totalorder %s116, %s118
    %p125 = scmp.eq.s32.totalorder %s19, 1
    %p126 = por %p124, %p125
    %p127 = scmp.ne.s32.totalorder %s118, %s119
    %p128 = scmp.eq.s32.totalorder %s19, 0
    %p129 = por %p127, %p128
    %p130 = scmp.ne.s32.totalorder %s118, %s119
    %p131 = scmp.eq.s32.totalorder %s20, 1
    %p132 = por %p130, %p131
    %p134 = scmp.ne.s32.totalorder %s119, %s133
    %p135 = scmp.eq.s32.totalorder %s20, 0
    %p136 = por %p134, %p135
    %s138 = sadd.s32 %s137, 1
    %p141 = scmp.eq.s32.totalorder %s14, 1
    %p142 = scmp.ne.s32.totalorder %s137, %s139
    %p143 = scmp.eq.s32.totalorder %s14, 0
    %p144 = por %p142, %p143
    %p145 = scmp.ne.s32.totalorder %s137, %s139
    %p146 = scmp.eq.s32.totalorder %s19, 1
    %p147 = por %p145, %p146
    %p148 = scmp.ne.s32.totalorder %s139, %s140
    %p149 = scmp.eq.s32.totalorder %s19, 0
    %p150 = por %p148, %p149
    %p151 = scmp.ne.s32.totalorder %s139, %s140
    %p152 = scmp.eq.s32.totalorder %s20, 1
    %p153 = por %p151, %p152
    %p155 = scmp.ne.s32.totalorder %s140, %s154
    %p156 = scmp.eq.s32.totalorder %s20, 0
    %p157 = por %p155, %p156
    %s158 = ssub.s32 %s14, %s21
    %p159 = scmp.eq.s32.totalorder %s158, 0
    %s161 = sadd.s32 %s160, 1
    %s162 = scalar_select %p159, %s160, %s161
    %p165 = pneg %p159
    %p166 = scmp.eq.s32.totalorder %s14, 1
    %p167 = por %p165, %p166
    %p168 = scmp.ne.s32.totalorder %s160, %s163
    %p169 = scmp.eq.s32.totalorder %s14, 0
    %p170 = por %p168, %p169
    %p171 = scmp.ne.s32.totalorder %s160, %s163
    %p172 = scmp.eq.s32.totalorder %s19, 1
    %p173 = por %p171, %p172
    %p174 = scmp.ne.s32.totalorder %s163, %s164
    %p175 = scmp.eq.s32.totalorder %s19, 0
    %p176 = por %p174, %p175
    %p177 = scmp.ne.s32.totalorder %s163, %s164
    %p178 = scmp.eq.s32.totalorder %s20, 1
    %p179 = por %p177, %p178
    %p181 = scmp.ne.s32.totalorder %s164, %s180
    %p182 = scmp.eq.s32.totalorder %s20, 0
    %p183 = por %p181, %p182
    %s184 = ssub.s32 %s14, %s21
    %p185 = scmp.eq.s32.totalorder %s184, 0
    %s187 = sadd.s32 %s186, 1
    %s188 = scalar_select %p185, %s186, %s187
    %p191 = pneg %p185
    %p192 = scmp.eq.s32.totalorder %s14, 1
    %p193 = por %p191, %p192
    %p194 = scmp.ne.s32.totalorder %s186, %s189
    %p195 = scmp.eq.s32.totalorder %s14, 0
    %p196 = por %p194, %p195
    %p197 = scmp.ne.s32.totalorder %s186, %s189
    %p198 = scmp.eq.s32.totalorder %s19, 1
    %p199 = por %p197, %p198
    %p200 = scmp.ne.s32.totalorder %s189, %s190
    %p201 = scmp.eq.s32.totalorder %s19, 0
    %p202 = por %p200, %p201
    %p203 = scmp.ne.s32.totalorder %s189, %s190
    %p204 = scmp.eq.s32.totalorder %s20, 1
    %p205 = por %p203, %p204
    %p207 = scmp.ne.s32.totalorder %s190, %s206
    %p208 = scmp.eq.s32.totalorder %s20, 0
    %p209 = por %p207, %p208
    %p210 = scmp.le.s32.totalorder 1, %s14
    %p211 = scmp.lt.s32.totalorder %s14, 3
    %p212 = pnand %p210, %p211
    %p213 = pneg %p212
    // Predicated region
    $region9: #{vdp_batchnorm_forward.3} parent=5 // pred_check
      _
    $region10: #{vdp_batchnorm_forward.3} parent=5 // pred_check_branch
      %215 = sbr.rel (%p212) target = $region12
    $region11: #{vdp_batchnorm_forward.3} parent=5 // pred_region
      %s216 = ssub.s32 %s14, 1
      // Predicated region
      $region13: #{vdp_batchnorm_forward.3} parent=11 // pred_check
        %p217 = pneg %p87
      $region14: #{vdp_batchnorm_forward.3} parent=11 // pred_check_branch
        %219 = sbr.rel (%p217) target = $region16
      $region15: #{vdp_batchnorm_forward.3} parent=11 // pred_region
        _
      $region16: #{vdp_batchnorm_forward.3} parent=11 // pred_fallthru
        _
      // Predicated region
      $region17: #{vdp_batchnorm_forward.3} parent=11 // pred_check
        %p220 = pneg %p108
      $region18: #{vdp_batchnorm_forward.3} parent=11 // pred_check_branch
        %222 = sbr.rel (%p220) target = $region20
      $region19: #{vdp_batchnorm_forward.3} parent=11 // pred_region
        _
      $region20: #{vdp_batchnorm_forward.3} parent=11 // pred_fallthru
        _
      // Predicated region
      $region21: #{vdp_batchnorm_forward.3} parent=11 // pred_check
        %p223 = pneg %p129
      $region22: #{vdp_batchnorm_forward.3} parent=11 // pred_check_branch
        %225 = sbr.rel (%p223) target = $region24
      $region23: #{vdp_batchnorm_forward.3} parent=11 // pred_region
        _
      $region24: #{vdp_batchnorm_forward.3} parent=11 // pred_fallthru
        _
      // Predicated region
      $region25: #{vdp_batchnorm_forward.3} parent=11 // pred_check
        %p226 = pneg %p150
      $region26: #{vdp_batchnorm_forward.3} parent=11 // pred_check_branch
        %228 = sbr.rel (%p226) target = $region28
      $region27: #{vdp_batchnorm_forward.3} parent=11 // pred_region
        _
      $region28: #{vdp_batchnorm_forward.3} parent=11 // pred_fallthru
        _
    $region12: #{vdp_batchnorm_forward.3} parent=5 // pred_fallthru
      _
    %p229 = scmp.lt.s32.totalorder %s14, 2
    // Predicated region
    $region29: #{vdp_batchnorm_forward.3} parent=5 // pred_check
      %p230 = pneg %p229
    $region30: #{vdp_batchnorm_forward.3} parent=5 // pred_check_branch
      %232 = sbr.rel (%p230) target = $region32
    $region31: #{vdp_batchnorm_forward.3} parent=5 // pred_region
      // Predicated region
      $region33: #{vdp_batchnorm_forward.3} parent=31 // pred_check
        %p233 = pneg %p34
      $region34: #{vdp_batchnorm_forward.3} parent=31 // pred_check_branch
        %235 = sbr.rel (%p233) target = $region36
      $region35: #{vdp_batchnorm_forward.3} parent=31 // pred_region
        %p236 = scmp.lt.s32.totalorder %s14, 1
        %s237 = scalar_select %p236, %s14, 1
        %s238 = smul.addr %s237, 2
        %s239 = smul.addr %s238, 8
        %s240 = scalar_lea.vmem %s0, %s239
      $region36: #{vdp_batchnorm_forward.3} parent=31 // pred_fallthru
        _
      // Predicated region
      $region37: #{vdp_batchnorm_forward.3} parent=31 // pred_check
        %p241 = pneg %p60
      $region38: #{vdp_batchnorm_forward.3} parent=31 // pred_check_branch
        %243 = sbr.rel (%p241) target = $region40
      $region39: #{vdp_batchnorm_forward.3} parent=31 // pred_region
        %p244 = scmp.lt.s32.totalorder %s14, 1
        %s245 = scalar_select %p244, %s14, 1
        %s246 = smul.addr %s245, 32
        %s247 = smul.addr %s246, 8
        %s248 = scalar_lea.vmem %s1, %s247
      $region40: #{vdp_batchnorm_forward.3} parent=31 // pred_fallthru
        _
    $region32: #{vdp_batchnorm_forward.3} parent=5 // pred_fallthru
      _
    %p249 = scmp.le.s32.totalorder 1, %s14
    %p250 = scmp.lt.s32.totalorder %s14, 3
    %p251 = pnand %p249, %p250
    %p252 = pneg %p251
    // Predicated region
    $region41: #{vdp_batchnorm_forward.3} parent=5 // pred_check
      _
    $region42: #{vdp_batchnorm_forward.3} parent=5 // pred_check_branch
      %254 = sbr.rel (%p251) target = $region44
    $region43: #{vdp_batchnorm_forward.3} parent=5 // pred_region
      %s255 = ssub.s32 %s14, 1
      %p256 = scmp.lt.s32.totalorder %s19, 1
      %s257 = scalar_select %p256, %s19, 1
      %s258 = smul.addr %s257, 2
      %s259 = smul.addr %s258, 8
      %s260 = scalar_lea.vmem %s0, %s259
      %p261 = pneg %p40
      %p262 = pneg %p37
      %p263 = scmp.lt.s32.totalorder %s19, 1
      %s264 = scalar_select %p263, %s19, 1
      %s265 = smul.addr %s264, 32
      %s266 = smul.addr %s265, 8
      %s267 = scalar_lea.vmem %s1, %s266
      %p268 = pneg %p66
      %p269 = pneg %p63
      %p270 = pneg %p87
      %p271 = pneg %p84
      %p272 = pneg %p108
      %p273 = pneg %p105
      %p274 = pneg %p129
      %p275 = pneg %p126
      %p276 = pneg %p150
      %p277 = pneg %p147
      %p278 = pneg %p176
      %p279 = pneg %p173
      %p280 = scmp.lt.s32.totalorder %s19, 1
      %s281 = scalar_select %p280, %s19, 1
      %s282 = smul.addr %s281, 2
      %s283 = smul.addr %s282, 8
      %s284 = scalar_lea.vmem %s6, %s283
      %p285 = pneg %p202
      %p286 = pneg %p199
      %p287 = scmp.lt.s32.totalorder %s19, 1
      %s288 = scalar_select %p287, %s19, 1
      %s289 = smul.addr %s288, 32
      %s290 = smul.addr %s289, 8
      %s291 = scalar_lea.vmem %s7, %s290
      %p292 = scmp.lt.s32.totalorder %s19, 1
      %s293 = scalar_select %p292, %s19, 1
      %s294 = smul.addr %s293, 2
      %s295 = smul.addr %s294, 8
      %s296 = scalar_lea.vmem %s0, %s295
      %p297 = scmp.lt.s32.totalorder %s19, 1
      %s298 = scalar_select %p297, %s19, 1
      %s299 = smul.addr %s298, 32
      %s300 = smul.addr %s299, 8
      %s301 = scalar_lea.vmem %s1, %s300
      %p302 = scmp.lt.s32.totalorder %s19, 1
      %s303 = scalar_select %p302, %s19, 1
      %s304 = smul.addr %s303, 2
      %s305 = smul.addr %s304, 8
      %s306 = scalar_lea.vmem %s6, %s305
      %p307 = scmp.lt.s32.totalorder %s19, 1
      %s308 = scalar_select %p307, %s19, 1
      %s309 = smul.addr %s308, 32
      %s310 = smul.addr %s309, 8
      %s311 = scalar_lea.vmem %s7, %s310
      %v312 = vld [vmem:[%s296] sm:$0xff]
      %v313 = vld [vmem:[%s296 + $0x8] sm:$0xff]
      %v314 = vld [vmem:[%s2] sm:$0xff]
      %316 = vset.pattern.permute.xlu0 0
      %317 = vperm.xlu0 %316, %v314
      %v318 = vpop.permute.xlu0 %317
      %v320 = vmul.f32 %v312, %v318
      %v321 = vmul.f32 %v313, %v318
      %v322 = vld [vmem:[%s3] sm:$0xff]
      %324 = vset.pattern.permute.xlu0 0
      %325 = vperm.xlu0 %324, %v322
      %v326 = vpop.permute.xlu0 %325
      %v328 = vadd.f32 %v320, %v326
      %v329 = vadd.f32 %v321, %v326
      %330 = vst [vmem:[%s306] sm:$0xff] %v328
      %331 = vst [vmem:[%s306 + $0x8] sm:$0xff] %v329
      %v332 = vld [vmem:[%s301] sm:$0xff]
      %v333 = vld [vmem:[%s301 + $0x8] sm:$0xff]
      %v334 = vld [vmem:[%s301 + $0x10] sm:$0xff]
      %v335 = vld [vmem:[%s301 + $0x18] sm:$0xff]
      %v336 = vld [vmem:[%s301 + $0x20] sm:$0xff]
      %v337 = vld [vmem:[%s301 + $0x28] sm:$0xff]
      %v338 = vld [vmem:[%s301 + $0x30] sm:$0xff]
      %v339 = vld [vmem:[%s301 + $0x38] sm:$0xff]
      %v340 = vld [vmem:[%s301 + $0x40] sm:$0xff]
      %v341 = vld [vmem:[%s301 + $0x48] sm:$0xff]
      %v342 = vld [vmem:[%s301 + $0x50] sm:$0xff]
      %v343 = vld [vmem:[%s301 + $0x58] sm:$0xff]
      %v344 = vld [vmem:[%s301 + $0x60] sm:$0xff]
      %v345 = vld [vmem:[%s301 + $0x68] sm:$0xff]
      %v346 = vld [vmem:[%s301 + $0x70] sm:$0xff]
      %v347 = vld [vmem:[%s301 + $0x78] sm:$0xff]
      %v348 = vld [vmem:[%s301 + $0x80] sm:$0xff]
      %v349 = vld [vmem:[%s301 + $0x88] sm:$0xff]
      %v350 = vld [vmem:[%s301 + $0x90] sm:$0xff]
      %v351 = vld [vmem:[%s301 + $0x98] sm:$0xff]
      %v352 = vld [vmem:[%s301 + $0xa0] sm:$0xff]
      %v353 = vld [vmem:[%s301 + $0xa8] sm:$0xff]
      %v354 = vld [vmem:[%s301 + $0xb0] sm:$0xff]
      %v355 = vld [vmem:[%s301 + $0xb8] sm:$0xff]
      %v356 = vld [vmem:[%s301 + $0xc0] sm:$0xff]
      %v357 = vld [vmem:[%s301 + $0xc8] sm:$0xff]
      %v358 = vld [vmem:[%s301 + $0xd0] sm:$0xff]
      %v359 = vld [vmem:[%s301 + $0xd8] sm:$0xff]
      %v360 = vld [vmem:[%s301 + $0xe0] sm:$0xff]
      %v361 = vld [vmem:[%s301 + $0xe8] sm:$0xff]
      %v362 = vld [vmem:[%s301 + $0xf0] sm:$0xff]
      %v363 = vld [vmem:[%s301 + $0xf8] sm:$0xff]
      %v364 = vld [vmem:[%s4] sm:$0x1]
      %v366 = vlaneseq
      %v367 = vshrl.u32 %v366, 7
      %v368 = vsub.s32 0, %v367
      %v369 = vrot.slane %v364, %v368
      %v371 = vmul.f32 %v332, %v369
      %v372 = vmul.f32 %v333, %v369
      %v373 = vmul.f32 %v334, %v369
      %v374 = vmul.f32 %v335, %v369
      %v375 = vmul.f32 %v336, %v369
      %v376 = vmul.f32 %v337, %v369
      %v377 = vmul.f32 %v338, %v369
      %v378 = vmul.f32 %v339, %v369
      %v379 = vmul.f32 %v340, %v369
      %v380 = vmul.f32 %v341, %v369
      %v381 = vmul.f32 %v342, %v369
      %v382 = vmul.f32 %v343, %v369
      %v383 = vmul.f32 %v344, %v369
      %v384 = vmul.f32 %v345, %v369
      %v385 = vmul.f32 %v346, %v369
      %v386 = vmul.f32 %v347, %v369
      %v387 = vmul.f32 %v348, %v369
      %v388 = vmul.f32 %v349, %v369
      %v389 = vmul.f32 %v350, %v369
      %v390 = vmul.f32 %v351, %v369
      %v391 = vmul.f32 %v352, %v369
      %v392 = vmul.f32 %v353, %v369
      %v393 = vmul.f32 %v354, %v369
      %v394 = vmul.f32 %v355, %v369
      %v395 = vmul.f32 %v356, %v369
      %v396 = vmul.f32 %v357, %v369
      %v397 = vmul.f32 %v358, %v369
      %v398 = vmul.f32 %v359, %v369
      %v399 = vmul.f32 %v360, %v369
      %v400 = vmul.f32 %v361, %v369
      %v401 = vmul.f32 %v362, %v369
      %v402 = vmul.f32 %v363, %v369
      %v403 = vld [vmem:[%s5] sm:$0x1]
      %v405 = vlaneseq
      %v406 = vshrl.u32 %v405, 7
      %v407 = vsub.s32 0, %v406
      %v408 = vrot.slane %v403, %v407
      %v410 = vadd.f32 %v371, %v408
      %v411 = vadd.f32 %v372, %v408
      %v412 = vadd.f32 %v373, %v408
      %v413 = vadd.f32 %v374, %v408
      %v414 = vadd.f32 %v375, %v408
      %v415 = vadd.f32 %v376, %v408
      %v416 = vadd.f32 %v377, %v408
      %v417 = vadd.f32 %v378, %v408
      %v418 = vadd.f32 %v379, %v408
      %v419 = vadd.f32 %v380, %v408
      %v420 = vadd.f32 %v381, %v408
      %v421 = vadd.f32 %v382, %v408
      %v422 = vadd.f32 %v383, %v408
      %v423 = vadd.f32 %v384, %v408
      %v424 = vadd.f32 %v385, %v408
      %v425 = vadd.f32 %v386, %v408
      %v426 = vadd.f32 %v387, %v408
      %v427 = vadd.f32 %v388, %v408
      %v428 = vadd.f32 %v389, %v408
      %v429 = vadd.f32 %v390, %v408
      %v430 = vadd.f32 %v391, %v408
      %v431 = vadd.f32 %v392, %v408
      %v432 = vadd.f32 %v393, %v408
      %v433 = vadd.f32 %v394, %v408
      %v434 = vadd.f32 %v395, %v408
      %v435 = vadd.f32 %v396, %v408
      %v436 = vadd.f32 %v397, %v408
      %v437 = vadd.f32 %v398, %v408
      %v438 = vadd.f32 %v399, %v408
      %v439 = vadd.f32 %v400, %v408
      %v440 = vadd.f32 %v401, %v408
      %v441 = vadd.f32 %v402, %v408
      %vm442 = vcmask 64512
      %443 = vst.msk [vmem:[%s311] sm:$0xff] %vm442, %v410
      %444 = vst.msk [vmem:[%s311 + $0x8] sm:$0xff] %vm442, %v411
      %445 = vst.msk [vmem:[%s311 + $0x10] sm:$0xff] %vm442, %v412
      %446 = vst.msk [vmem:[%s311 + $0x18] sm:$0xff] %vm442, %v413
      %447 = vst.msk [vmem:[%s311 + $0x20] sm:$0xff] %vm442, %v414
      %448 = vst.msk [vmem:[%s311 + $0x28] sm:$0xff] %vm442, %v415
      %449 = vst.msk [vmem:[%s311 + $0x30] sm:$0xff] %vm442, %v416
      %450 = vst.msk [vmem:[%s311 + $0x38] sm:$0xff] %vm442, %v417
      %451 = vst.msk [vmem:[%s311 + $0x40] sm:$0xff] %vm442, %v418
      %452 = vst.msk [vmem:[%s311 + $0x48] sm:$0xff] %vm442, %v419
      %453 = vst.msk [vmem:[%s311 + $0x50] sm:$0xff] %vm442, %v420
      %454 = vst.msk [vmem:[%s311 + $0x58] sm:$0xff] %vm442, %v421
      %455 = vst.msk [vmem:[%s311 + $0x60] sm:$0xff] %vm442, %v422
      %456 = vst.msk [vmem:[%s311 + $0x68] sm:$0xff] %vm442, %v423
      %457 = vst.msk [vmem:[%s311 + $0x70] sm:$0xff] %vm442, %v424
      %458 = vst.msk [vmem:[%s311 + $0x78] sm:$0xff] %vm442, %v425
      %459 = vst.msk [vmem:[%s311 + $0x80] sm:$0xff] %vm442, %v426
      %460 = vst.msk [vmem:[%s311 + $0x88] sm:$0xff] %vm442, %v427
      %461 = vst.msk [vmem:[%s311 + $0x90] sm:$0xff] %vm442, %v428
      %462 = vst.msk [vmem:[%s311 + $0x98] sm:$0xff] %vm442, %v429
      %463 = vst.msk [vmem:[%s311 + $0xa0] sm:$0xff] %vm442, %v430
      %464 = vst.msk [vmem:[%s311 + $0xa8] sm:$0xff] %vm442, %v431
      %465 = vst.msk [vmem:[%s311 + $0xb0] sm:$0xff] %vm442, %v432
      %466 = vst.msk [vmem:[%s311 + $0xb8] sm:$0xff] %vm442, %v433
      %467 = vst.msk [vmem:[%s311 + $0xc0] sm:$0xff] %vm442, %v434
      %468 = vst.msk [vmem:[%s311 + $0xc8] sm:$0xff] %vm442, %v435
      %469 = vst.msk [vmem:[%s311 + $0xd0] sm:$0xff] %vm442, %v436
      %470 = vst.msk [vmem:[%s311 + $0xd8] sm:$0xff] %vm442, %v437
      %471 = vst.msk [vmem:[%s311 + $0xe0] sm:$0xff] %vm442, %v438
      %472 = vst.msk [vmem:[%s311 + $0xe8] sm:$0xff] %vm442, %v439
      %473 = vst.msk [vmem:[%s311 + $0xf0] sm:$0xff] %vm442, %v440
      %474 = vst.msk [vmem:[%s311 + $0xf8] sm:$0xff] %vm442, %v441
      %p475 = scmp.lt.s32.totalorder %s19, 1
      %s476 = scalar_select %p475, %s19, 1
      %s477 = smul.addr %s476, 2
      %s478 = smul.addr %s477, 8
      %s479 = scalar_lea.vmem %s6, %s478
      %p480 = scmp.lt.s32.totalorder %s19, 1
      %s481 = scalar_select %p480, %s19, 1
      %s482 = smul.addr %s481, 32
      %s483 = smul.addr %s482, 8
      %s484 = scalar_lea.vmem %s7, %s483
      // Predicated region
      $region45: #{vdp_batchnorm_forward.3} parent=43 // pred_check
        %p485 = pneg %p173
      $region46: #{vdp_batchnorm_forward.3} parent=43 // pred_check_branch
        %487 = sbr.rel (%p485) target = $region48
      $region47: #{vdp_batchnorm_forward.3} parent=43 // pred_region
        _
      $region48: #{vdp_batchnorm_forward.3} parent=43 // pred_fallthru
        _
      // Predicated region
      $region49: #{vdp_batchnorm_forward.3} parent=43 // pred_check
        %p488 = pneg %p199
      $region50: #{vdp_batchnorm_forward.3} parent=43 // pred_check_branch
        %490 = sbr.rel (%p488) target = $region52
      $region51: #{vdp_batchnorm_forward.3} parent=43 // pred_region
        _
      $region52: #{vdp_batchnorm_forward.3} parent=43 // pred_fallthru
        _
    $region44: #{vdp_batchnorm_forward.3} parent=5 // pred_fallthru
      _
    %p491 = scmp.le.s32.totalorder 2, %s14
    // Predicated region
    $region53: #{vdp_batchnorm_forward.3} parent=5 // pred_check
      %p492 = pneg %p491
    $region54: #{vdp_batchnorm_forward.3} parent=5 // pred_check_branch
      %494 = sbr.rel (%p492) target = $region56
    $region55: #{vdp_batchnorm_forward.3} parent=5 // pred_region
      %s495 = ssub.s32 %s14, 2
      // Predicated region
      $region57: #{vdp_batchnorm_forward.3} parent=55 // pred_check
        %p496 = pneg %p179
      $region58: #{vdp_batchnorm_forward.3} parent=55 // pred_check_branch
        %498 = sbr.rel (%p496) target = $region60
      $region59: #{vdp_batchnorm_forward.3} parent=55 // pred_region
        %p499 = scmp.lt.s32.totalorder %s20, 1
        %s500 = scalar_select %p499, %s20, 1
        %s501 = smul.addr %s500, 2
        %s502 = smul.addr %s501, 8
        %s503 = scalar_lea.vmem %s6, %s502
      $region60: #{vdp_batchnorm_forward.3} parent=55 // pred_fallthru
        _
      // Predicated region
      $region61: #{vdp_batchnorm_forward.3} parent=55 // pred_check
        %p504 = pneg %p205
      $region62: #{vdp_batchnorm_forward.3} parent=55 // pred_check_branch
        %506 = sbr.rel (%p504) target = $region64
      $region63: #{vdp_batchnorm_forward.3} parent=55 // pred_region
        %p507 = scmp.lt.s32.totalorder %s20, 1
        %s508 = scalar_select %p507, %s20, 1
        %s509 = smul.addr %s508, 32
        %s510 = smul.addr %s509, 8
        %s511 = scalar_lea.vmem %s7, %s510
      $region64: #{vdp_batchnorm_forward.3} parent=55 // pred_fallthru
        _
    $region56: #{vdp_batchnorm_forward.3} parent=5 // pred_fallthru
      _
  $region6: #{vdp_batchnorm_forward.3} parent=0 // loop_footer
    %s18 = sadd.s32 1, %s14
  $region7: #{vdp_batchnorm_forward.3} parent=0 // loop_footer_branch
    %13 = sbr.rel target = $region3
  $region8: #{vdp_batchnorm_forward.3} parent=0 // loop_exit
    _

// kernel: vdp_batchnorm_forward.2
$region0: #{vdp_batchnorm_forward.2}
  #allocation0 [shape = 'u32[]', space=smem, size = 0x4, offset = 0x4, fixed_abs, tag = 'smem constant byte address 0x4 - core index']
  #allocation1 [shape = 'u32[144,128]{1,0:T(1,128)}', space=vmem, size = 0x12000, scoped, tag = 'internal scratch']
  %s0 = inlined_call_operand.vmem [shape: f32[2,8,256], index: 0, kind: input, shape index: {}]
  %s1 = inlined_call_operand.vmem [shape: f32[1,8], index: 1, kind: output, shape index: {0}]
  %s2 = inlined_call_operand.vmem [shape: f32[1,8], index: 2, kind: output, shape index: {1}]
  %3 = xla_tuple %s1, %s2
  %s4 = sld [smem:[#allocation0]]
  $region49: #{vdp_batchnorm_forward.2} parent=0
    _
  %s6 = ssub.s32 1, %s4
  %s7 = scalar_select 0, %s6, %s4
  loop: start=0, step=1, limit=4
  $region2: #{vdp_batchnorm_forward.2} parent=0 // loop_pre_header
    _
  $region3: #{vdp_batchnorm_forward.2} parent=0 // loop_header
    %s9 = sphi 0, %s13
    %p10 = scmp.ge.s32.totalorder %s9, 4
    %s19 = sphi 0, %s21
    %s22 = sphi 0, %s19
    %s23 = sphi 0, %s22
    %s39 = sphi 0, %s23
    %s43 = sphi 0, %s43
    %s45 = sphi 0, %s43
    %s46 = sphi 0, %s45
    %s60 = sphi 0, %s46
    %s64 = sphi 0, %s64
    %s66 = sphi 0, %s64
    %s67 = sphi 0, %s66
    %s81 = sphi 0, %s67
  $region4: #{vdp_batchnorm_forward.2} parent=0 // loop_header_branch
    %12 = sbr.rel (%p10) target = $region8
  $region5: #{vdp_batchnorm_forward.2} parent=0 // loop_body
    %s14 = ssub.s32 %s9, 1
    %s15 = ssub.s32 %s9, 2
    %s16 = sadd.s32 %s9, 1
    %s17 = ssub.s32 %s9, %s16
    %p18 = scmp.eq.s32.totalorder %s17, 0
    %s20 = sadd.s32 %s19, 1
    %s21 = scalar_select %p18, %s19, %s20
    %p24 = pneg %p18
    %p25 = scmp.eq.s32.totalorder %s9, 1
    %p26 = por %p24, %p25
    %p27 = scmp.ne.s32.totalorder %s19, %s22
    %p28 = scmp.eq.s32.totalorder %s9, 0
    %p29 = por %p27, %p28
    %p30 = scmp.ne.s32.totalorder %s19, %s22
    %p31 = scmp.eq.s32.totalorder %s14, 1
    %p32 = por %p30, %p31
    %p33 = scmp.ne.s32.totalorder %s22, %s23
    %p34 = scmp.eq.s32.totalorder %s14, 0
    %p35 = por %p33, %p34
    %p36 = scmp.ne.s32.totalorder %s22, %s23
    %p37 = scmp.eq.s32.totalorder %s15, 1
    %p38 = por %p36, %p37
    %p40 = scmp.ne.s32.totalorder %s23, %s39
    %p41 = scmp.eq.s32.totalorder %s15, 0
    %p42 = por %p40, %p41
    %s44 = sadd.s32 %s43, 1
    %p47 = scmp.eq.s32.totalorder %s9, 1
    %p48 = scmp.ne.s32.totalorder %s43, %s45
    %p49 = scmp.eq.s32.totalorder %s9, 0
    %p50 = por %p48, %p49
    %p51 = scmp.ne.s32.totalorder %s43, %s45
    %p52 = scmp.eq.s32.totalorder %s14, 1
    %p53 = por %p51, %p52
    %p54 = scmp.ne.s32.totalorder %s45, %s46
    %p55 = scmp.eq.s32.totalorder %s14, 0
    %p56 = por %p54, %p55
    %p57 = scmp.ne.s32.totalorder %s45, %s46
    %p58 = scmp.eq.s32.totalorder %s15, 1
    %p59 = por %p57, %p58
    %p61 = scmp.ne.s32.totalorder %s46, %s60
    %p62 = scmp.eq.s32.totalorder %s15, 0
    %p63 = por %p61, %p62
    %s65 = sadd.s32 %s64, 1
    %p68 = scmp.eq.s32.totalorder %s9, 1
    %p69 = scmp.ne.s32.totalorder %s64, %s66
    %p70 = scmp.eq.s32.totalorder %s9, 0
    %p71 = por %p69, %p70
    %p72 = scmp.ne.s32.totalorder %s64, %s66
    %p73 = scmp.eq.s32.totalorder %s14, 1
    %p74 = por %p72, %p73
    %p75 = scmp.ne.s32.totalorder %s66, %s67
    %p76 = scmp.eq.s32.totalorder %s14, 0
    %p77 = por %p75, %p76
    %p78 = scmp.ne.s32.totalorder %s66, %s67
    %p79 = scmp.eq.s32.totalorder %s15, 1
    %p80 = por %p78, %p79
    %p82 = scmp.ne.s32.totalorder %s67, %s81
    %p83 = scmp.eq.s32.totalorder %s15, 0
    %p84 = por %p82, %p83
    %p85 = scmp.le.s32.totalorder 1, %s9
    %p86 = scmp.lt.s32.totalorder %s9, 3
    %p87 = pnand %p85, %p86
    %p88 = pneg %p87
    // Predicated region
    $region9: #{vdp_batchnorm_forward.2} parent=5 // pred_check
      _
    $region10: #{vdp_batchnorm_forward.2} parent=5 // pred_check_branch
      %90 = sbr.rel (%p87) target = $region12
    $region11: #{vdp_batchnorm_forward.2} parent=5 // pred_region
      %s91 = ssub.s32 %s9, 1
    $region12: #{vdp_batchnorm_forward.2} parent=5 // pred_fallthru
      _
    %p92 = scmp.lt.s32.totalorder %s9, 2
    // Predicated region
    $region13: #{vdp_batchnorm_forward.2} parent=5 // pred_check
      %p93 = pneg %p92
    $region14: #{vdp_batchnorm_forward.2} parent=5 // pred_check_branch
      %95 = sbr.rel (%p93) target = $region16
    $region15: #{vdp_batchnorm_forward.2} parent=5 // pred_region
      // Predicated region
      $region17: #{vdp_batchnorm_forward.2} parent=15 // pred_check
        %p96 = pneg %p29
      $region18: #{vdp_batchnorm_forward.2} parent=15 // pred_check_branch
        %98 = sbr.rel (%p96) target = $region20
      $region19: #{vdp_batchnorm_forward.2} parent=15 // pred_region
        %p99 = scmp.lt.s32.totalorder %s9, 1
        %s100 = scalar_select %p99, %s9, 1
        %s101 = smul.addr %s100, 2
        %s102 = smul.addr %s101, 8
        %s103 = scalar_lea.vmem %s0, %s102
      $region20: #{vdp_batchnorm_forward.2} parent=15 // pred_fallthru
        _
    $region16: #{vdp_batchnorm_forward.2} parent=5 // pred_fallthru
      _
    %p104 = scmp.le.s32.totalorder 1, %s9
    %p105 = scmp.lt.s32.totalorder %s9, 3
    %p106 = pnand %p104, %p105
    %p107 = pneg %p106
    // Predicated region
    $region21: #{vdp_batchnorm_forward.2} parent=5 // pred_check
      _
    $region22: #{vdp_batchnorm_forward.2} parent=5 // pred_check_branch
      %109 = sbr.rel (%p106) target = $region24
    $region23: #{vdp_batchnorm_forward.2} parent=5 // pred_region
      %s110 = ssub.s32 %s9, 1
      %p111 = scmp.lt.s32.totalorder %s14, 1
      %s112 = scalar_select %p111, %s14, 1
      %s113 = smul.addr %s112, 2
      %s114 = smul.addr %s113, 8
      %s115 = scalar_lea.vmem %s0, %s114
      %p116 = pneg %p35
      %p117 = pneg %p32
      %p118 = pneg %p56
      %p119 = pneg %p53
      %p120 = pneg %p77
      %p121 = pneg %p74
      %p122 = scmp.lt.s32.totalorder %s14, 1
      %s123 = scalar_select %p122, %s14, 1
      %s124 = smul.addr %s123, 2
      %s125 = smul.addr %s124, 8
      %s126 = scalar_lea.vmem %s0, %s125
      %v127 = vld [vmem:[%s126] sm:$0xff]
      %v128 = vld [vmem:[%s126 + $0x8] sm:$0xff]
      %v129 = vadd.f32 %v127, %v128
      %130 = vadd.xlane.f32.xlu0 %v129
      %v131 = vpop.xlane.xlu0 %130
      %v132 = vmul.f32 %v127, %v127
      %v133 = vmul.f32 %v128, %v128
      %v134 = vadd.f32 %v132, %v133
      %135 = vadd.xlane.f32.xlu0 %v134
      %v136 = vpop.xlane.xlu0 %135
      %p137 = scmp.eq.s32.totalorder %s14, 0
      // Predicated region
      $region25: #{vdp_batchnorm_forward.2} parent=23 // pred_check
        %p138 = pneg %p137
      $region26: #{vdp_batchnorm_forward.2} parent=23 // pred_check_branch
        %140 = sbr.rel (%p138) target = $region28
      $region27: #{vdp_batchnorm_forward.2} parent=23 // pred_region
        %vm141 = vcmask 57344
        %142 = vst.msk [vmem:[%s1] sm:$0x1] %vm141, 0.0
        %143 = vst.msk [vmem:[%s2] sm:$0x1] %vm141, 0.0
      $region28: #{vdp_batchnorm_forward.2} parent=23 // pred_fallthru
        _
      %v144 = vld [vmem:[%s1] sm:$0x1]
      %v146 = vlaneseq
      %v147 = vshrl.u32 %v146, 7
      %v148 = vsub.s32 0, %v147
      %v149 = vrot.slane %v131, %v148
      %v150 = vlaneseq
      %v151 = vshrl.u32 %v150, 7
      %v152 = vsub.s32 1, %v151
      %v153 = vrot.slane %v131, %v152
      %v154 = vlaneseq
      %v155 = vshrl.u32 %v154, 7
      %v156 = vsub.s32 2, %v155
      %v157 = vrot.slane %v131, %v156
      %v158 = vlaneseq
      %v159 = vshrl.u32 %v158, 7
      %v160 = vsub.s32 3, %v159
      %v161 = vrot.slane %v131, %v160
      %v162 = vlaneseq
      %v163 = vshrl.u32 %v162, 7
      %v164 = vsub.s32 4, %v163
      %v165 = vrot.slane %v131, %v164
      %v166 = vlaneseq
      %v167 = vshrl.u32 %v166, 7
      %v168 = vsub.s32 5, %v167
      %v169 = vrot.slane %v131, %v168
      %v170 = vlaneseq
      %v171 = vshrl.u32 %v170, 7
      %v172 = vsub.s32 6, %v171
      %v173 = vrot.slane %v131, %v172
      %v174 = vlaneseq
      %v175 = vshrl.u32 %v174, 7
      %v176 = vsub.s32 7, %v175
      %v177 = vrot.slane %v131, %v176
      %v178 = vcombine.low %v149, %v153
      %v179 = vcombine.low %v157, %v161
      %v180 = vcombine.low %v165, %v169
      %v181 = vcombine.low %v173, %v177
      %v183 = vunpack.c.l.s4 1966171168
      %v184 = vunpack.c.0.s8 %v183
      %v185 = vlaneseq
      %v186 = vshrl.u32 %v185, 7
      %v187 = vsub.s32 %v184, %v186
      %v188 = vrot.slane %v178, %v187
      %v190 = vunpack.c.l.s4 1966171168
      %v191 = vunpack.c.0.s8 %v190
      %v192 = vlaneseq
      %v193 = vshrl.u32 %v192, 7
      %v194 = vsub.s32 %v191, %v193
      %v195 = vrot.slane %v179, %v194
      %v197 = vunpack.c.l.s4 1966171168
      %v198 = vunpack.c.0.s8 %v197
      %v199 = vlaneseq
      %v200 = vshrl.u32 %v199, 7
      %v201 = vsub.s32 %v198, %v200
      %v202 = vrot.slane %v180, %v201
      %v204 = vunpack.c.l.s4 1966171168
      %v205 = vunpack.c.0.s8 %v204
      %v206 = vlaneseq
      %v207 = vshrl.u32 %v206, 7
      %v208 = vsub.s32 %v205, %v207
      %v209 = vrot.slane %v181, %v208
      %v210 = vcombine.low %v188, %v195
      %v211 = vcombine.low %v202, %v209
      %v213 = vunpack.c.l.s4 1966171168
      %v214 = vunpack.c.0.s8 %v213
      %v215 = vlaneseq
      %v216 = vshrl.u32 %v215, 7
      %v217 = vsub.s32 %v214, %v216
      %v218 = vrot.slane %v210, %v217
      %v220 = vunpack.c.l.s4 1966171168
      %v221 = vunpack.c.0.s8 %v220
      %v222 = vlaneseq
      %v223 = vshrl.u32 %v222, 7
      %v224 = vsub.s32 %v221, %v223
      %v225 = vrot.slane %v211, %v224
      %v226 = vcombine.low %v218, %v225
      %227 = vset.pattern.permute.xlu0 0
      %228 = vperm.xlu0 %227, %v226
      %v229 = vpop.permute.xlu0 %228
      %v230 = vlaneseq
      %v231 = vand.u32 %v230, 127
      %v232 = vlaneseq
      %v233 = vshrl.u32 %v232, 7
      %v234 = vsub.s32 %v231, %v233
      %v235 = vrot.slane %v229, %v234
      %v237 = vunpack.c.l.s4 1966171168
      %v238 = vunpack.c.0.s8 %v237
      %v239 = vlaneseq
      %v240 = vshrl.u32 %v239, 7
      %v241 = vsub.s32 %v238, %v240
      %v242 = vrot.slane %v235, %v241
      %v244 = vunpack.c.l.s4 1966171168
      %v245 = vunpack.c.0.s8 %v244
      %v246 = vlaneseq
      %v247 = vshrl.u32 %v246, 7
      %v248 = vsub.s32 %v245, %v247
      %v249 = vrot.slane %v242, %v248
      %v251 = vadd.f32 %v144, %v249
      %vm252 = vcmask 57344
      %253 = vst.msk [vmem:[%s1] sm:$0x1] %vm252, %v251
      %v254 = vld [vmem:[%s2] sm:$0x1]
      %v256 = vlaneseq
      %v257 = vshrl.u32 %v256, 7
      %v258 = vsub.s32 0, %v257
      %v259 = vrot.slane %v136, %v258
      %v260 = vlaneseq
      %v261 = vshrl.u32 %v260, 7
      %v262 = vsub.s32 1, %v261
      %v263 = vrot.slane %v136, %v262
      %v264 = vlaneseq
      %v265 = vshrl.u32 %v264, 7
      %v266 = vsub.s32 2, %v265
      %v267 = vrot.slane %v136, %v266
      %v268 = vlaneseq
      %v269 = vshrl.u32 %v268, 7
      %v270 = vsub.s32 3, %v269
      %v271 = vrot.slane %v136, %v270
      %v272 = vlaneseq
      %v273 = vshrl.u32 %v272, 7
      %v274 = vsub.s32 4, %v273
      %v275 = vrot.slane %v136, %v274
      %v276 = vlaneseq
      %v277 = vshrl.u32 %v276, 7
      %v278 = vsub.s32 5, %v277
      %v279 = vrot.slane %v136, %v278
      %v280 = vlaneseq
      %v281 = vshrl.u32 %v280, 7
      %v282 = vsub.s32 6, %v281
      %v283 = vrot.slane %v136, %v282
      %v284 = vlaneseq
      %v285 = vshrl.u32 %v284, 7
      %v286 = vsub.s32 7, %v285
      %v287 = vrot.slane %v136, %v286
      %v288 = vcombine.low %v259, %v263
      %v289 = vcombine.low %v267, %v271
      %v290 = vcombine.low %v275, %v279
      %v291 = vcombine.low %v283, %v287
      %v293 = vunpack.c.l.s4 1966171168
      %v294 = vunpack.c.0.s8 %v293
      %v295 = vlaneseq
      %v296 = vshrl.u32 %v295, 7
      %v297 = vsub.s32 %v294, %v296
      %v298 = vrot.slane %v288, %v297
      %v300 = vunpack.c.l.s4 1966171168
      %v301 = vunpack.c.0.s8 %v300
      %v302 = vlaneseq
      %v303 = vshrl.u32 %v302, 7
      %v304 = vsub.s32 %v301, %v303
      %v305 = vrot.slane %v289, %v304
      %v307 = vunpack.c.l.s4 1966171168
      %v308 = vunpack.c.0.s8 %v307
      %v309 = vlaneseq
      %v310 = vshrl.u32 %v309, 7
      %v311 = vsub.s32 %v308, %v310
      %v312 = vrot.slane %v290, %v311
      %v314 = vunpack.c.l.s4 1966171168
      %v315 = vunpack.c.0.s8 %v314
      %v316 = vlaneseq
      %v317 = vshrl.u32 %v316, 7
      %v318 = vsub.s32 %v315, %v317
      %v319 = vrot.slane %v291, %v318
      %v320 = vcombine.low %v298, %v305
      %v321 = vcombine.low %v312, %v319
      %v323 = vunpack.c.l.s4 1966171168
      %v324 = vunpack.c.0.s8 %v323
      %v325 = vlaneseq
      %v326 = vshrl.u32 %v325, 7
      %v327 = vsub.s32 %v324, %v326
      %v328 = vrot.slane %v320, %v327
      %v330 = vunpack.c.l.s4 1966171168
      %v331 = vunpack.c.0.s8 %v330
      %v332 = vlaneseq
      %v333 = vshrl.u32 %v332, 7
      %v334 = vsub.s32 %v331, %v333
      %v335 = vrot.slane %v321, %v334
      %v336 = vcombine.low %v328, %v335
      %337 = vset.pattern.permute.xlu0 0
      %338 = vperm.xlu0 %337, %v336
      %v339 = vpop.permute.xlu0 %338
      %v340 = vlaneseq
      %v341 = vshrl.u32 %v340, 7
      %v342 = vsub.s32 %v231, %v341
      %v343 = vrot.slane %v339, %v342
      %v345 = vunpack.c.l.s4 1966171168
      %v346 = vunpack.c.0.s8 %v345
      %v347 = vlaneseq
      %v348 = vshrl.u32 %v347, 7
      %v349 = vsub.s32 %v346, %v348
      %v350 = vrot.slane %v343, %v349
      %v352 = vunpack.c.l.s4 1966171168
      %v353 = vunpack.c.0.s8 %v352
      %v354 = vlaneseq
      %v355 = vshrl.u32 %v354, 7
      %v356 = vsub.s32 %v353, %v355
      %v357 = vrot.slane %v350, %v356
      %v359 = vadd.f32 %v254, %v357
      %360 = vst.msk [vmem:[%s2] sm:$0x1] %vm252, %v359
      // Predicated region
      $region29: #{vdp_batchnorm_forward.2} parent=23 // pred_check
        %p361 = pneg %p53
      $region30: #{vdp_batchnorm_forward.2} parent=23 // pred_check_branch
        %363 = sbr.rel (%p361) target = $region32
      $region31: #{vdp_batchnorm_forward.2} parent=23 // pred_region
        _
      $region32: #{vdp_batchnorm_forward.2} parent=23 // pred_fallthru
        _
      // Predicated region
      $region33: #{vdp_batchnorm_forward.2} parent=23 // pred_check
        %p364 = pneg %p74
      $region34: #{vdp_batchnorm_forward.2} parent=23 // pred_check_branch
        %366 = sbr.rel (%p364) target = $region36
      $region35: #{vdp_batchnorm_forward.2} parent=23 // pred_region
        _
      $region36: #{vdp_batchnorm_forward.2} parent=23 // pred_fallthru
        _
      // Predicated region
      $region37: #{vdp_batchnorm_forward.2} parent=23 // pred_check
        %p367 = pneg %p53
      $region38: #{vdp_batchnorm_forward.2} parent=23 // pred_check_branch
        %369 = sbr.rel (%p367) target = $region40
      $region39: #{vdp_batchnorm_forward.2} parent=23 // pred_region
        _
      $region40: #{vdp_batchnorm_forward.2} parent=23 // pred_fallthru
        _
      // Predicated region
      $region41: #{vdp_batchnorm_forward.2} parent=23 // pred_check
        %p370 = pneg %p74
      $region42: #{vdp_batchnorm_forward.2} parent=23 // pred_check_branch
        %372 = sbr.rel (%p370) target = $region44
      $region43: #{vdp_batchnorm_forward.2} parent=23 // pred_region
        _
      $region44: #{vdp_batchnorm_forward.2} parent=23 // pred_fallthru
        _
    $region24: #{vdp_batchnorm_forward.2} parent=5 // pred_fallthru
      _
    %p373 = scmp.le.s32.totalorder 2, %s9
    // Predicated region
    $region45: #{vdp_batchnorm_forward.2} parent=5 // pred_check
      %p374 = pneg %p373
    $region46: #{vdp_batchnorm_forward.2} parent=5 // pred_check_branch
      %376 = sbr.rel (%p374) target = $region48
    $region47: #{vdp_batchnorm_forward.2} parent=5 // pred_region
      %s377 = ssub.s32 %s9, 2
    $region48: #{vdp_batchnorm_forward.2} parent=5 // pred_fallthru
      _
  $region6: #{vdp_batchnorm_forward.2} parent=0 // loop_footer
    %s13 = sadd.s32 1, %s9
  $region7: #{vdp_batchnorm_forward.2} parent=0 // loop_footer_branch
    %8 = sbr.rel target = $region3
  $region8: #{vdp_batchnorm_forward.2} parent=0 // loop_exit
    _

</llo_original>
